<compile_context>
chip_gen: v7x
topology: tpu7x:2x2x1
jax: 0.10.0
libtpu: 0.0.40
codegen_flags: <defaults>
</compile_context>

<pallas_src>
import functools

import jax
import jax.numpy as jnp
from jax.experimental import pallas as pl
from jax.experimental.pallas import tpu as pltpu


# ----------------------------------------------------------------------------
# Kernel: fused 1x1 conv (VPU MACs, BN-scale folded into weights) + shift +
#         LeakyReLU(0.1) + 2x nearest upsample via ONE replication matmul.
# ----------------------------------------------------------------------------
def _fused_upsample_kernel(x_ref, rep_ref, w_ref, shift_ref, o_ref):
    # x_ref:     (Cin, TS, LANE_IN)     VMEM  (R image rows packed per lane-row)
    # rep_ref:   (LANE_IN, LANE_OUT)    VMEM  one-hot replication matrix (grid-resident)
    # w_ref:     (Cout, Cin)            SMEM  conv weights * bn_scale (scalar reads)
    # shift_ref: (Cout,)                SMEM  beta + (conv_bias - mean) * bn_scale
    # o_ref:     (Cout, TS, LANE_OUT)   VMEM  packed, lane-dense upsampled output
    cin, ts, _ = x_ref.shape
    cout, _, lane_out = o_ref.shape

    rep = rep_ref[...]                                   # resident across grid steps

    # Load the (few) input channel planes once; math in f32.
    x_ch = [x_ref[ci].astype(jnp.float32) for ci in range(cin)]

    # NOTE: the unrolled VPU channel contraction targets small Cin/Cout (as in
    # this module).  For large channel counts use a padded lane-dense matmul.
    rows = []
    for co in range(cout):
        acc = x_ch[0] * w_ref[co, 0]
        for ci in range(1, cin):
            acc = acc + x_ch[ci] * w_ref[co, ci]
        acc = acc + shift_ref[co]                        # bias/BN shift (folded)
        acc = jnp.where(acc > 0, acc, 0.1 * acc)         # LeakyReLU(0.1)
        rows.append(acc)

    # One batched replication matmul (Cout*TS, LANE_IN) x (LANE_IN, LANE_OUT);
    # keep it f32 so the one-hot selection is exact.
    stacked = jnp.concatenate(rows, axis=0)
    y = jnp.dot(stacked, rep, preferred_element_type=jnp.float32)
    o_ref[...] = y.reshape(cout, ts, lane_out).astype(o_ref.dtype)


# ----------------------------------------------------------------------------
# Replication matrix (built once in the wrapper, constant-folded by XLA).
# Packed output column d maps back to packed input column src(d); the packed
# output array reshapes CONTIGUOUSLY to (up*H, up*W) outside the kernel.
# ----------------------------------------------------------------------------
def _build_replication_matrix(img_w, r, up, dtype=jnp.float32):
    rw = r * img_w
    out_w = up * up * rw
    sw = up * img_w
    d = jnp.arange(out_w, dtype=jnp.int32)
    src = (d // sw // up) * img_w + (d % sw) // up
    rep = (jnp.arange(rw, dtype=jnp.int32)[:, None] == src[None, :]).astype(dtype)
    return rep


# ----------------------------------------------------------------------------
# Tiling heuristics (no hard failures for awkward H/W; lane-dense preferred)
# ----------------------------------------------------------------------------
def _choose_tiling(n, h, w, cin, cout, up, *, in_elem_bytes=4, out_elem_bytes=4,
                   target_out_tile_bytes=6 << 20, vmem_cap=48 << 20):
    # --- row packing R: prefer packed output lane width (up*up*R*W) % 128 == 0
    #     (unmasked stores), keep R*W <= 256, prefer >= 8 super-rows. ---
    cands, r = [], 1
    while h % r == 0:
        cands.append(r)
        r *= 2
    best_r, best_key = 1, None
    for cand in cands:
        rw = cand * w
        if rw > 256:
            continue
        lane_out = up * up * rw
        key = (lane_out % 128 == 0, (h // cand) >= 8, rw)
        if best_key is None or key > best_key:
            best_r, best_key = cand, key
    r = best_r
    hs = h // r
    lane_in = r * w
    lane_out = up * up * lane_in

    # --- TS: super-rows per grid step (multiple of 8 when possible). ---
    if hs % 8 == 0:
        divisors = [t for t in range(8, hs + 1, 8) if hs % t == 0]
    else:
        divisors = [hs]                        # full-extent block is always legal

    rep_bytes = lane_in * lane_out * 4

    def tile_bytes(t):
        in_b = cin * t * lane_in * in_elem_bytes
        out_b = cout * t * lane_out * out_elem_bytes
        return in_b, out_b

    fitting = [t for t in divisors
               if tile_bytes(t)[1] <= target_out_tile_bytes
               and 2 * sum(tile_bytes(t)) + rep_bytes <= vmem_cap]
    ts = max(fitting) if fitting else min(divisors)
    # Keep >= 2 grid steps when the batch is tiny (v7x has 2 TensorCores).
    if n < 2 and ts == hs and len(divisors) > 1:
        ts = sorted(divisors)[-2]

    in_b, out_b = tile_bytes(ts)
    need = 2 * (in_b + out_b) + rep_bytes + (1 << 20)
    vmem_limit = int(min(max(2 * need, 32 << 20), vmem_cap))
    return r, ts, hs, lane_in, lane_out, vmem_limit


# ----------------------------------------------------------------------------
# Pallas wrapper: NCHW in -> NCHW (upsampled) out; only free reshapes outside.
# ----------------------------------------------------------------------------
def conv1x1_bn_lrelu_upsample(x, w_folded, bn_shift, *, up=2, out_dtype=None):
    """x: (N, Cin, H, W) -> (N, Cout, up*H, up*W), fully fused in one kernel."""
    up = int(up)
    n, cin, h, w = x.shape
    cout = w_folded.shape[0]
    # Keep f32 output by default: the one-hot replication matmul is exact in f32;
    # pass out_dtype=jnp.bfloat16 to halve HBM store traffic if the consumer allows.
    out_dtype = x.dtype if out_dtype is None else out_dtype

    r, ts, hs, lane_in, lane_out, vmem_limit = _choose_tiling(
        n, h, w, cin, cout, up,
        in_elem_bytes=jnp.dtype(x.dtype).itemsize,
        out_elem_bytes=jnp.dtype(out_dtype).itemsize)

    x_packed = x.reshape(n, cin, hs, lane_in)            # contiguous -> free
    rep = _build_replication_matrix(w, r, up)            # (lane_in, lane_out) f32

    grid = (n, hs // ts)

    out_packed = pl.pallas_call(
        _fused_upsample_kernel,
        out_shape=jax.ShapeDtypeStruct((n, cout, hs, lane_out), out_dtype),
        grid_spec=pltpu.PrefetchScalarGridSpec(
            num_scalar_prefetch=0,
            grid=grid,
            in_specs=[
                pl.BlockSpec((None, cin, ts, lane_in), lambda ni, hi: (ni, 0, hi, 0)),
                pl.BlockSpec((lane_in, lane_out), lambda ni, hi: (0, 0)),  # resident
                pl.BlockSpec(memory_space=pltpu.MemorySpace.SMEM),  # folded weights
                pl.BlockSpec(memory_space=pltpu.MemorySpace.SMEM),  # folded shift
            ],
            out_specs=pl.BlockSpec((None, cout, ts, lane_out),
                                   lambda ni, hi: (ni, 0, hi, 0)),
        ),
        compiler_params=pltpu.CompilerParams(
            dimension_semantics=("parallel", "parallel"),
            vmem_limit_bytes=vmem_limit,
        ),
    )(x_packed, rep, w_folded, bn_shift)

    return out_packed.reshape(n, cout, up * h, up * w)   # contiguous -> free


def upsample_forward(x_nchw, params, *, scale=2, eps=1e-5):
    w4 = params["conv_w"]           # (Cout, Cin, 1, 1)
    b = params["conv_b"]            # (Cout,)
    gamma = params["bn_gamma"]      # (Cout,)
    beta = params["bn_beta"]        # (Cout,)
    mean = params["bn_mean"]        # (Cout,)
    var = params["bn_var"]          # (Cout,)

    cout, cin = w4.shape[0], w4.shape[1]
    w2 = w4.reshape(cout, cin).astype(jnp.float32)

    bn_scale = (gamma / jnp.sqrt(var + eps)).astype(jnp.float32)
    # Fold BN scale into the conv weights and the conv bias into the BN shift:
    #   (x.w + b)*s + (beta - mean*s) == x.(w*s) + (b*s + beta - mean*s)
    w_folded = (w2 * bn_scale[:, None]).astype(jnp.float32)
    bn_shift = (b * bn_scale + beta - mean * bn_scale).astype(jnp.float32)

    return conv1x1_bn_lrelu_upsample(x_nchw, w_folded, bn_shift, up=scale)


# ----------------------------------------------------------------------------
# Pure-JAX reference (mirrors the PyTorch semantics) for verification
# ----------------------------------------------------------------------------
def ref_forward(x_nchw, params, *, scale=2, eps=1e-5):
    w4 = params["conv_w"]
    cout, cin = w4.shape[0], w4.shape[1]
    conv = jnp.einsum("nchw,oc->nohw", x_nchw, w4.reshape(cout, cin))
    conv = conv + params["conv_b"][None, :, None, None]
    inv = 1.0 / jnp.sqrt(params["bn_var"] + eps)
    bn = (conv - params["bn_mean"][None, :, None, None]) * (
        params["bn_gamma"] * inv
    )[None, :, None, None] + params["bn_beta"][None, :, None, None]
    act = jnp.where(bn > 0, bn, 0.1 * bn)
    return jnp.repeat(jnp.repeat(act, scale, axis=2), scale, axis=3)


if __name__ == "__main__":
    in_channels, out_channels = 4, 8
    N, H, W = 2, 16, 16

    key = jax.random.PRNGKey(0)
    k_x, k_w, k_b, k_g, k_be, k_m, k_v = jax.random.split(key, 7)

    x = jax.random.normal(k_x, (N, in_channels, H, W), dtype=jnp.float32)

    params = {
        "conv_w": jax.random.normal(k_w, (out_channels, in_channels, 1, 1),
                                    dtype=jnp.float32) * 0.1,
        "conv_b": jax.random.normal(k_b, (out_channels,), dtype=jnp.float32) * 0.1,
        "bn_gamma": 1.0 + 0.1 * jax.random.normal(k_g, (out_channels,), dtype=jnp.float32),
        "bn_beta": 0.1 * jax.random.normal(k_be, (out_channels,), dtype=jnp.float32),
        "bn_mean": 0.1 * jax.random.normal(k_m, (out_channels,), dtype=jnp.float32),
        "bn_var": jnp.abs(jax.random.normal(k_v, (out_channels,), dtype=jnp.float32)) + 0.5,
    }

    fwd = jax.jit(functools.partial(upsample_forward, scale=2))
    out = jax.block_until_ready(fwd(x, params))

    ref = ref_forward(x, params, scale=2)
    assert out.shape == (N, out_channels, 2 * H, 2 * W), out.shape
    err = float(jnp.max(jnp.abs(out - ref)))
    assert jnp.allclose(out, ref, atol=1e-4, rtol=1e-4), err

    print("KERNEL_OK")
</pallas_src>

<mosaic_0001>
module attributes {stable_mosaic.version = 11 : i64} {
  func.func @_fused_upsample_kernel(%arg0: i32, %arg1: i32, %arg2: memref<1x4x8x32xf32, #tpu.memory_space<vmem>>, %arg3: memref<32x128xf32, #tpu.memory_space<vmem>>, %arg4: memref<8x4xf32, #tpu.memory_space<smem>>, %arg5: memref<8xf32, #tpu.memory_space<smem>>, %arg6: memref<1x8x8x128xf32, #tpu.memory_space<vmem>>) attributes {dimension_semantics = [#tpu.dimension_semantics<parallel>, #tpu.dimension_semantics<parallel>], iteration_bounds = array<i64: 2, 1>, scalar_prefetch = 0 : i64, scratch_operands = 0 : i64, tpu.core_type = #tpu.core_type<tc>, window_params = [{transform_indices = @transform_0, window_bounds = array<i64: 1, 4, 8, 32>}, {pipeline_mode = #tpu.pipeline_mode<synchronous>, transform_indices = @transform_1, window_bounds = array<i64: 32, 128>}, {transform_indices = @transform_2, window_bounds = array<i64: 8, 4>}, {transform_indices = @transform_3, window_bounds = array<i64: 8>}, {transform_indices = @transform_4, window_bounds = array<i64: 1, 8, 8, 128>}]} {
    %c0 = arith.constant 0 : index
    %c0_0 = arith.constant 0 : index
    %0 = vector.load %arg3[%c0, %c0_0] : memref<32x128xf32, #tpu.memory_space<vmem>>, vector<32x128xf32>
    %c0_1 = arith.constant 0 : index
    %c0_2 = arith.constant 0 : index
    %c0_3 = arith.constant 0 : index
    %c0_4 = arith.constant 0 : index
    %1 = vector.load %arg2[%c0_1, %c0_2, %c0_3, %c0_4] : memref<1x4x8x32xf32, #tpu.memory_space<vmem>>, vector<1x1x8x32xf32>
    %2 = vector.shape_cast %1 : vector<1x1x8x32xf32> to vector<8x32xf32>
    %c0_5 = arith.constant 0 : index
    %c1 = arith.constant 1 : index
    %c0_6 = arith.constant 0 : index
    %c0_7 = arith.constant 0 : index
    %3 = vector.load %arg2[%c0_5, %c1, %c0_6, %c0_7] : memref<1x4x8x32xf32, #tpu.memory_space<vmem>>, vector<1x1x8x32xf32>
    %4 = vector.shape_cast %3 : vector<1x1x8x32xf32> to vector<8x32xf32>
    %c0_8 = arith.constant 0 : index
    %c2 = arith.constant 2 : index
    %c0_9 = arith.constant 0 : index
    %c0_10 = arith.constant 0 : index
    %5 = vector.load %arg2[%c0_8, %c2, %c0_9, %c0_10] : memref<1x4x8x32xf32, #tpu.memory_space<vmem>>, vector<1x1x8x32xf32>
    %6 = vector.shape_cast %5 : vector<1x1x8x32xf32> to vector<8x32xf32>
    %c0_11 = arith.constant 0 : index
    %c3 = arith.constant 3 : index
    %c0_12 = arith.constant 0 : index
    %c0_13 = arith.constant 0 : index
    %7 = vector.load %arg2[%c0_11, %c3, %c0_12, %c0_13] : memref<1x4x8x32xf32, #tpu.memory_space<vmem>>, vector<1x1x8x32xf32>
    %8 = vector.shape_cast %7 : vector<1x1x8x32xf32> to vector<8x32xf32>
    %c0_14 = arith.constant 0 : index
    %c0_15 = arith.constant 0 : index
    %9 = memref.load %arg4[%c0_14, %c0_15] : memref<8x4xf32, #tpu.memory_space<smem>>
    %10 = vector.broadcast %9 : f32 to vector<8x32xf32>
    %11 = arith.mulf %2, %10 : vector<8x32xf32>
    %c0_16 = arith.constant 0 : index
    %c1_17 = arith.constant 1 : index
    %12 = memref.load %arg4[%c0_16, %c1_17] : memref<8x4xf32, #tpu.memory_space<smem>>
    %13 = vector.broadcast %12 : f32 to vector<8x32xf32>
    %14 = arith.mulf %4, %13 : vector<8x32xf32>
    %15 = arith.addf %11, %14 : vector<8x32xf32>
    %c0_18 = arith.constant 0 : index
    %c2_19 = arith.constant 2 : index
    %16 = memref.load %arg4[%c0_18, %c2_19] : memref<8x4xf32, #tpu.memory_space<smem>>
    %17 = vector.broadcast %16 : f32 to vector<8x32xf32>
    %18 = arith.mulf %6, %17 : vector<8x32xf32>
    %19 = arith.addf %15, %18 : vector<8x32xf32>
    %c0_20 = arith.constant 0 : index
    %c3_21 = arith.constant 3 : index
    %20 = memref.load %arg4[%c0_20, %c3_21] : memref<8x4xf32, #tpu.memory_space<smem>>
    %21 = vector.broadcast %20 : f32 to vector<8x32xf32>
    %22 = arith.mulf %8, %21 : vector<8x32xf32>
    %23 = arith.addf %19, %22 : vector<8x32xf32>
    %c0_22 = arith.constant 0 : index
    %24 = memref.load %arg5[%c0_22] : memref<8xf32, #tpu.memory_space<smem>>
    %25 = vector.broadcast %24 : f32 to vector<8x32xf32>
    %26 = arith.addf %23, %25 : vector<8x32xf32>
    %cst = arith.constant 0.000000e+00 : f32
    %27 = vector.broadcast %cst : f32 to vector<8x32xf32>
    %28 = arith.cmpf ogt, %26, %27 : vector<8x32xf32>
    %cst_23 = arith.constant 1.000000e-01 : f32
    %29 = vector.broadcast %cst_23 : f32 to vector<8x32xf32>
    %30 = arith.mulf %29, %26 : vector<8x32xf32>
    %31 = arith.select %28, %26, %30 : vector<8x32xi1>, vector<8x32xf32>
    %c1_24 = arith.constant 1 : index
    %c0_25 = arith.constant 0 : index
    %32 = memref.load %arg4[%c1_24, %c0_25] : memref<8x4xf32, #tpu.memory_space<smem>>
    %33 = vector.broadcast %32 : f32 to vector<8x32xf32>
    %34 = arith.mulf %2, %33 : vector<8x32xf32>
    %c1_26 = arith.constant 1 : index
    %c1_27 = arith.constant 1 : index
    %35 = memref.load %arg4[%c1_26, %c1_27] : memref<8x4xf32, #tpu.memory_space<smem>>
    %36 = vector.broadcast %35 : f32 to vector<8x32xf32>
    %37 = arith.mulf %4, %36 : vector<8x32xf32>
    %38 = arith.addf %34, %37 : vector<8x32xf32>
    %c1_28 = arith.constant 1 : index
    %c2_29 = arith.constant 2 : index
    %39 = memref.load %arg4[%c1_28, %c2_29] : memref<8x4xf32, #tpu.memory_space<smem>>
    %40 = vector.broadcast %39 : f32 to vector<8x32xf32>
    %41 = arith.mulf %6, %40 : vector<8x32xf32>
    %42 = arith.addf %38, %41 : vector<8x32xf32>
    %c1_30 = arith.constant 1 : index
    %c3_31 = arith.constant 3 : index
    %43 = memref.load %arg4[%c1_30, %c3_31] : memref<8x4xf32, #tpu.memory_space<smem>>
    %44 = vector.broadcast %43 : f32 to vector<8x32xf32>
    %45 = arith.mulf %8, %44 : vector<8x32xf32>
    %46 = arith.addf %42, %45 : vector<8x32xf32>
    %c1_32 = arith.constant 1 : index
    %47 = memref.load %arg5[%c1_32] : memref<8xf32, #tpu.memory_space<smem>>
    %48 = vector.broadcast %47 : f32 to vector<8x32xf32>
    %49 = arith.addf %46, %48 : vector<8x32xf32>
    %cst_33 = arith.constant 0.000000e+00 : f32
    %50 = vector.broadcast %cst_33 : f32 to vector<8x32xf32>
    %51 = arith.cmpf ogt, %49, %50 : vector<8x32xf32>
    %cst_34 = arith.constant 1.000000e-01 : f32
    %52 = vector.broadcast %cst_34 : f32 to vector<8x32xf32>
    %53 = arith.mulf %52, %49 : vector<8x32xf32>
    %54 = arith.select %51, %49, %53 : vector<8x32xi1>, vector<8x32xf32>
    %c2_35 = arith.constant 2 : index
    %c0_36 = arith.constant 0 : index
    %55 = memref.load %arg4[%c2_35, %c0_36] : memref<8x4xf32, #tpu.memory_space<smem>>
    %56 = vector.broadcast %55 : f32 to vector<8x32xf32>
    %57 = arith.mulf %2, %56 : vector<8x32xf32>
    %c2_37 = arith.constant 2 : index
    %c1_38 = arith.constant 1 : index
    %58 = memref.load %arg4[%c2_37, %c1_38] : memref<8x4xf32, #tpu.memory_space<smem>>
    %59 = vector.broadcast %58 : f32 to vector<8x32xf32>
    %60 = arith.mulf %4, %59 : vector<8x32xf32>
    %61 = arith.addf %57, %60 : vector<8x32xf32>
    %c2_39 = arith.constant 2 : index
    %c2_40 = arith.constant 2 : index
    %62 = memref.load %arg4[%c2_39, %c2_40] : memref<8x4xf32, #tpu.memory_space<smem>>
    %63 = vector.broadcast %62 : f32 to vector<8x32xf32>
    %64 = arith.mulf %6, %63 : vector<8x32xf32>
    %65 = arith.addf %61, %64 : vector<8x32xf32>
    %c2_41 = arith.constant 2 : index
    %c3_42 = arith.constant 3 : index
    %66 = memref.load %arg4[%c2_41, %c3_42] : memref<8x4xf32, #tpu.memory_space<smem>>
    %67 = vector.broadcast %66 : f32 to vector<8x32xf32>
    %68 = arith.mulf %8, %67 : vector<8x32xf32>
    %69 = arith.addf %65, %68 : vector<8x32xf32>
    %c2_43 = arith.constant 2 : index
    %70 = memref.load %arg5[%c2_43] : memref<8xf32, #tpu.memory_space<smem>>
    %71 = vector.broadcast %70 : f32 to vector<8x32xf32>
    %72 = arith.addf %69, %71 : vector<8x32xf32>
    %cst_44 = arith.constant 0.000000e+00 : f32
    %73 = vector.broadcast %cst_44 : f32 to vector<8x32xf32>
    %74 = arith.cmpf ogt, %72, %73 : vector<8x32xf32>
    %cst_45 = arith.constant 1.000000e-01 : f32
    %75 = vector.broadcast %cst_45 : f32 to vector<8x32xf32>
    %76 = arith.mulf %75, %72 : vector<8x32xf32>
    %77 = arith.select %74, %72, %76 : vector<8x32xi1>, vector<8x32xf32>
    %c3_46 = arith.constant 3 : index
    %c0_47 = arith.constant 0 : index
    %78 = memref.load %arg4[%c3_46, %c0_47] : memref<8x4xf32, #tpu.memory_space<smem>>
    %79 = vector.broadcast %78 : f32 to vector<8x32xf32>
    %80 = arith.mulf %2, %79 : vector<8x32xf32>
    %c3_48 = arith.constant 3 : index
    %c1_49 = arith.constant 1 : index
    %81 = memref.load %arg4[%c3_48, %c1_49] : memref<8x4xf32, #tpu.memory_space<smem>>
    %82 = vector.broadcast %81 : f32 to vector<8x32xf32>
    %83 = arith.mulf %4, %82 : vector<8x32xf32>
    %84 = arith.addf %80, %83 : vector<8x32xf32>
    %c3_50 = arith.constant 3 : index
    %c2_51 = arith.constant 2 : index
    %85 = memref.load %arg4[%c3_50, %c2_51] : memref<8x4xf32, #tpu.memory_space<smem>>
    %86 = vector.broadcast %85 : f32 to vector<8x32xf32>
    %87 = arith.mulf %6, %86 : vector<8x32xf32>
    %88 = arith.addf %84, %87 : vector<8x32xf32>
    %c3_52 = arith.constant 3 : index
    %c3_53 = arith.constant 3 : index
    %89 = memref.load %arg4[%c3_52, %c3_53] : memref<8x4xf32, #tpu.memory_space<smem>>
    %90 = vector.broadcast %89 : f32 to vector<8x32xf32>
    %91 = arith.mulf %8, %90 : vector<8x32xf32>
    %92 = arith.addf %88, %91 : vector<8x32xf32>
    %c3_54 = arith.constant 3 : index
    %93 = memref.load %arg5[%c3_54] : memref<8xf32, #tpu.memory_space<smem>>
    %94 = vector.broadcast %93 : f32 to vector<8x32xf32>
    %95 = arith.addf %92, %94 : vector<8x32xf32>
    %cst_55 = arith.constant 0.000000e+00 : f32
    %96 = vector.broadcast %cst_55 : f32 to vector<8x32xf32>
    %97 = arith.cmpf ogt, %95, %96 : vector<8x32xf32>
    %cst_56 = arith.constant 1.000000e-01 : f32
    %98 = vector.broadcast %cst_56 : f32 to vector<8x32xf32>
    %99 = arith.mulf %98, %95 : vector<8x32xf32>
    %100 = arith.select %97, %95, %99 : vector<8x32xi1>, vector<8x32xf32>
    %c4 = arith.constant 4 : index
    %c0_57 = arith.constant 0 : index
    %101 = memref.load %arg4[%c4, %c0_57] : memref<8x4xf32, #tpu.memory_space<smem>>
    %102 = vector.broadcast %101 : f32 to vector<8x32xf32>
    %103 = arith.mulf %2, %102 : vector<8x32xf32>
    %c4_58 = arith.constant 4 : index
    %c1_59 = arith.constant 1 : index
    %104 = memref.load %arg4[%c4_58, %c1_59] : memref<8x4xf32, #tpu.memory_space<smem>>
    %105 = vector.broadcast %104 : f32 to vector<8x32xf32>
    %106 = arith.mulf %4, %105 : vector<8x32xf32>
    %107 = arith.addf %103, %106 : vector<8x32xf32>
    %c4_60 = arith.constant 4 : index
    %c2_61 = arith.constant 2 : index
    %108 = memref.load %arg4[%c4_60, %c2_61] : memref<8x4xf32, #tpu.memory_space<smem>>
    %109 = vector.broadcast %108 : f32 to vector<8x32xf32>
    %110 = arith.mulf %6, %109 : vector<8x32xf32>
    %111 = arith.addf %107, %110 : vector<8x32xf32>
    %c4_62 = arith.constant 4 : index
    %c3_63 = arith.constant 3 : index
    %112 = memref.load %arg4[%c4_62, %c3_63] : memref<8x4xf32, #tpu.memory_space<smem>>
    %113 = vector.broadcast %112 : f32 to vector<8x32xf32>
    %114 = arith.mulf %8, %113 : vector<8x32xf32>
    %115 = arith.addf %111, %114 : vector<8x32xf32>
    %c4_64 = arith.constant 4 : index
    %116 = memref.load %arg5[%c4_64] : memref<8xf32, #tpu.memory_space<smem>>
    %117 = vector.broadcast %116 : f32 to vector<8x32xf32>
    %118 = arith.addf %115, %117 : vector<8x32xf32>
    %cst_65 = arith.constant 0.000000e+00 : f32
    %119 = vector.broadcast %cst_65 : f32 to vector<8x32xf32>
    %120 = arith.cmpf ogt, %118, %119 : vector<8x32xf32>
    %cst_66 = arith.constant 1.000000e-01 : f32
    %121 = vector.broadcast %cst_66 : f32 to vector<8x32xf32>
    %122 = arith.mulf %121, %118 : vector<8x32xf32>
    %123 = arith.select %120, %118, %122 : vector<8x32xi1>, vector<8x32xf32>
    %c5 = arith.constant 5 : index
    %c0_67 = arith.constant 0 : index
    %124 = memref.load %arg4[%c5, %c0_67] : memref<8x4xf32, #tpu.memory_space<smem>>
    %125 = vector.broadcast %124 : f32 to vector<8x32xf32>
    %126 = arith.mulf %2, %125 : vector<8x32xf32>
    %c5_68 = arith.constant 5 : index
    %c1_69 = arith.constant 1 : index
    %127 = memref.load %arg4[%c5_68, %c1_69] : memref<8x4xf32, #tpu.memory_space<smem>>
    %128 = vector.broadcast %127 : f32 to vector<8x32xf32>
    %129 = arith.mulf %4, %128 : vector<8x32xf32>
    %130 = arith.addf %126, %129 : vector<8x32xf32>
    %c5_70 = arith.constant 5 : index
    %c2_71 = arith.constant 2 : index
    %131 = memref.load %arg4[%c5_70, %c2_71] : memref<8x4xf32, #tpu.memory_space<smem>>
    %132 = vector.broadcast %131 : f32 to vector<8x32xf32>
    %133 = arith.mulf %6, %132 : vector<8x32xf32>
    %134 = arith.addf %130, %133 : vector<8x32xf32>
    %c5_72 = arith.constant 5 : index
    %c3_73 = arith.constant 3 : index
    %135 = memref.load %arg4[%c5_72, %c3_73] : memref<8x4xf32, #tpu.memory_space<smem>>
    %136 = vector.broadcast %135 : f32 to vector<8x32xf32>
    %137 = arith.mulf %8, %136 : vector<8x32xf32>
    %138 = arith.addf %134, %137 : vector<8x32xf32>
    %c5_74 = arith.constant 5 : index
    %139 = memref.load %arg5[%c5_74] : memref<8xf32, #tpu.memory_space<smem>>
    %140 = vector.broadcast %139 : f32 to vector<8x32xf32>
    %141 = arith.addf %138, %140 : vector<8x32xf32>
    %cst_75 = arith.constant 0.000000e+00 : f32
    %142 = vector.broadcast %cst_75 : f32 to vector<8x32xf32>
    %143 = arith.cmpf ogt, %141, %142 : vector<8x32xf32>
    %cst_76 = arith.constant 1.000000e-01 : f32
    %144 = vector.broadcast %cst_76 : f32 to vector<8x32xf32>
    %145 = arith.mulf %144, %141 : vector<8x32xf32>
    %146 = arith.select %143, %141, %145 : vector<8x32xi1>, vector<8x32xf32>
    %c6 = arith.constant 6 : index
    %c0_77 = arith.constant 0 : index
    %147 = memref.load %arg4[%c6, %c0_77] : memref<8x4xf32, #tpu.memory_space<smem>>
    %148 = vector.broadcast %147 : f32 to vector<8x32xf32>
    %149 = arith.mulf %2, %148 : vector<8x32xf32>
    %c6_78 = arith.constant 6 : index
    %c1_79 = arith.constant 1 : index
    %150 = memref.load %arg4[%c6_78, %c1_79] : memref<8x4xf32, #tpu.memory_space<smem>>
    %151 = vector.broadcast %150 : f32 to vector<8x32xf32>
    %152 = arith.mulf %4, %151 : vector<8x32xf32>
    %153 = arith.addf %149, %152 : vector<8x32xf32>
    %c6_80 = arith.constant 6 : index
    %c2_81 = arith.constant 2 : index
    %154 = memref.load %arg4[%c6_80, %c2_81] : memref<8x4xf32, #tpu.memory_space<smem>>
    %155 = vector.broadcast %154 : f32 to vector<8x32xf32>
    %156 = arith.mulf %6, %155 : vector<8x32xf32>
    %157 = arith.addf %153, %156 : vector<8x32xf32>
    %c6_82 = arith.constant 6 : index
    %c3_83 = arith.constant 3 : index
    %158 = memref.load %arg4[%c6_82, %c3_83] : memref<8x4xf32, #tpu.memory_space<smem>>
    %159 = vector.broadcast %158 : f32 to vector<8x32xf32>
    %160 = arith.mulf %8, %159 : vector<8x32xf32>
    %161 = arith.addf %157, %160 : vector<8x32xf32>
    %c6_84 = arith.constant 6 : index
    %162 = memref.load %arg5[%c6_84] : memref<8xf32, #tpu.memory_space<smem>>
    %163 = vector.broadcast %162 : f32 to vector<8x32xf32>
    %164 = arith.addf %161, %163 : vector<8x32xf32>
    %cst_85 = arith.constant 0.000000e+00 : f32
    %165 = vector.broadcast %cst_85 : f32 to vector<8x32xf32>
    %166 = arith.cmpf ogt, %164, %165 : vector<8x32xf32>
    %cst_86 = arith.constant 1.000000e-01 : f32
    %167 = vector.broadcast %cst_86 : f32 to vector<8x32xf32>
    %168 = arith.mulf %167, %164 : vector<8x32xf32>
    %169 = arith.select %166, %164, %168 : vector<8x32xi1>, vector<8x32xf32>
    %c7 = arith.constant 7 : index
    %c0_87 = arith.constant 0 : index
    %170 = memref.load %arg4[%c7, %c0_87] : memref<8x4xf32, #tpu.memory_space<smem>>
    %171 = vector.broadcast %170 : f32 to vector<8x32xf32>
    %172 = arith.mulf %2, %171 : vector<8x32xf32>
    %c7_88 = arith.constant 7 : index
    %c1_89 = arith.constant 1 : index
    %173 = memref.load %arg4[%c7_88, %c1_89] : memref<8x4xf32, #tpu.memory_space<smem>>
    %174 = vector.broadcast %173 : f32 to vector<8x32xf32>
    %175 = arith.mulf %4, %174 : vector<8x32xf32>
    %176 = arith.addf %172, %175 : vector<8x32xf32>
    %c7_90 = arith.constant 7 : index
    %c2_91 = arith.constant 2 : index
    %177 = memref.load %arg4[%c7_90, %c2_91] : memref<8x4xf32, #tpu.memory_space<smem>>
    %178 = vector.broadcast %177 : f32 to vector<8x32xf32>
    %179 = arith.mulf %6, %178 : vector<8x32xf32>
    %180 = arith.addf %176, %179 : vector<8x32xf32>
    %c7_92 = arith.constant 7 : index
    %c3_93 = arith.constant 3 : index
    %181 = memref.load %arg4[%c7_92, %c3_93] : memref<8x4xf32, #tpu.memory_space<smem>>
    %182 = vector.broadcast %181 : f32 to vector<8x32xf32>
    %183 = arith.mulf %8, %182 : vector<8x32xf32>
    %184 = arith.addf %180, %183 : vector<8x32xf32>
    %c7_94 = arith.constant 7 : index
    %185 = memref.load %arg5[%c7_94] : memref<8xf32, #tpu.memory_space<smem>>
    %186 = vector.broadcast %185 : f32 to vector<8x32xf32>
    %187 = arith.addf %184, %186 : vector<8x32xf32>
    %cst_95 = arith.constant 0.000000e+00 : f32
    %188 = vector.broadcast %cst_95 : f32 to vector<8x32xf32>
    %189 = arith.cmpf ogt, %187, %188 : vector<8x32xf32>
    %cst_96 = arith.constant 1.000000e-01 : f32
    %190 = vector.broadcast %cst_96 : f32 to vector<8x32xf32>
    %191 = arith.mulf %190, %187 : vector<8x32xf32>
    %192 = arith.select %189, %187, %191 : vector<8x32xi1>, vector<8x32xf32>
    %193 = tpu.concatenate %31, %54, %77, %100, %123, %146, %169, %192 in 0 : vector<8x32xf32>, vector<8x32xf32>, vector<8x32xf32>, vector<8x32xf32>, vector<8x32xf32>, vector<8x32xf32>, vector<8x32xf32>, vector<8x32xf32> -> vector<64x32xf32>
    %cst_97 = arith.constant dense<0.000000e+00> : vector<64x128xf32>
    %194 = tpu.matmul %193, %0, %cst_97 {dimension_numbers = #tpu.dot_dimension_numbers<[1], [0], [0], [1], [0, 0, 1, 1], [], []>} : vector<64x32xf32>, vector<32x128xf32>, vector<64x128xf32> -> vector<64x128xf32>
    %195 = vector.shape_cast %194 : vector<64x128xf32> to vector<8x8x128xf32>
    %c0_98 = arith.constant 0 : index
    %c0_99 = arith.constant 0 : index
    %c0_100 = arith.constant 0 : index
    %c0_101 = arith.constant 0 : index
    %196 = vector.load %arg6[%c0_98, %c0_99, %c0_100, %c0_101] : memref<1x8x8x128xf32, #tpu.memory_space<vmem>>, vector<1x8x8x128xf32>
    %197 = vector.shape_cast %196 : vector<1x8x8x128xf32> to vector<8x8x128xf32>
    %198 = vector.shape_cast %195 : vector<8x8x128xf32> to vector<1x8x8x128xf32>
    tpu.vector_store %arg6[%c0_98, %c0_99, %c0_100, %c0_101], %198 {strides = array<i32>} : memref<1x8x8x128xf32, #tpu.memory_space<vmem>>, vector<1x8x8x128xf32>,
    return
  }
  func.func @transform_0(%arg0: i32, %arg1: i32) -> (i32, i32, i32, i32) {
    %c0_i32 = arith.constant 0 : i32
    %c0_i32_0 = arith.constant 0 : i32
    %c0_i32_1 = arith.constant 0 : i32
    return %arg0, %c0_i32, %arg1, %c0_i32_0 : i32, i32, i32, i32
  }
  func.func @transform_1(%arg0: i32, %arg1: i32) -> (i32, i32) {
    %c0_i32 = arith.constant 0 : i32
    %c0_i32_0 = arith.constant 0 : i32
    %c0_i32_1 = arith.constant 0 : i32
    return %c0_i32, %c0_i32_0 : i32, i32
  }
  func.func @transform_2(%arg0: i32, %arg1: i32) -> (i32, i32) {
    %c0_i32 = arith.constant 0 : i32
    %c0_i32_0 = arith.constant 0 : i32
    %c0_i32_1 = arith.constant 0 : i32
    return %c0_i32, %c0_i32_0 : i32, i32
  }
  func.func @transform_3(%arg0: i32, %arg1: i32) -> i32 {
    %c0_i32 = arith.constant 0 : i32
    %c0_i32_0 = arith.constant 0 : i32
    return %c0_i32 : i32
  }
  func.func @transform_4(%arg0: i32, %arg1: i32) -> (i32, i32, i32, i32) {
    %c0_i32 = arith.constant 0 : i32
    %c0_i32_0 = arith.constant 0 : i32
    %c0_i32_1 = arith.constant 0 : i32
    return %arg0, %c0_i32, %arg1, %c0_i32_0 : i32, i32, i32, i32
  }
}

</mosaic_0001>

<llo_original>
// kernel: upsample_forward.1
$region0: #{upsample_forward.1}
  #allocation0 [shape = 'u32[]', space=smem, size = 0x4, offset = 0x4, fixed_abs, tag = 'smem constant byte address 0x4 - core index']
  #allocation1 [shape = 'u32[144,128]{1,0:T(1,128)}', space=vmem, size = 0x12000, scoped, tag = 'internal scratch']
  %s0 = inlined_call_operand.vmem [shape: f32[2,4,8,32], index: 0, kind: input, shape index: {}]
  %s1 = inlined_call_operand.vmem [shape: f32[32,128], index: 1, kind: input, shape index: {}]
  %s2 = inlined_call_operand.vmem [shape: f32[8,4], index: 2, kind: input, shape index: {}]
  %s3 = inlined_call_operand.vmem [shape: f32[8], index: 3, kind: input, shape index: {}]
  %s4 = inlined_call_operand.vmem [shape: f32[2,8,8,128], index: 4, kind: output, shape index: {}]
  %s5 = sld [smem:[#allocation0]]
  $region57: #{upsample_forward.1} parent=0
    _
  %s7 = ssub.s32 1, %s5
  %s8 = scalar_select 0, %s7, %s5
  $region1: #{upsample_forward.1} parent=0
    #allocation2 [shape = 'u8[4096]{0}', space=smem, size = 0x1000, scoped, tag = 'input window, operand 2, single buffered']
    #allocation3 [shape = 's32[2]{0}', space=sflag, size = 0x8, scoped, tag = 'scoped memory for upsample_forward.1']
    #allocation4 [shape = 'u8[512]{0}', space=smem, size = 0x200, scoped, tag = 'input window, operand 3, single buffered']
    #allocation5 [shape = 's32[1]{0}', space=sflag, size = 0x4, scoped, tag = 'scoped memory for upsample_forward.1']
    %9 = vsyncpa [#allocation3], 0
    %10 = vsyncpa [#allocation5], 0
    loop: start=0, step=1, limit=4
    $region2: #{upsample_forward.1} parent=1 // loop_pre_header
      _
    $region3: #{upsample_forward.1} parent=1 // loop_header
      %s12 = sphi 0, %s16
      %p13 = scmp.ge.s32.totalorder %s12, 4
      %s19 = sphi 0, %s31
      %s20 = sphi 0, %s27
      %s21 = sphi 0, %s19
      %s22 = sphi 0, %s20
      %s23 = sphi 0, %s21
      %s24 = sphi 0, %s22
      %s36 = sphi 0, %s38
      %s39 = sphi 0, %s36
      %s40 = sphi 0, %s39
      %s56 = sphi 0, %s40
      %s60 = sphi 0, %s60
      %s62 = sphi 0, %s60
      %s63 = sphi 0, %s62
      %s77 = sphi 0, %s63
      %s81 = sphi 0, %s81
      %s83 = sphi 0, %s81
      %s84 = sphi 0, %s83
      %s98 = sphi 0, %s84
      %s102 = sphi 0, %s102
      %s104 = sphi 0, %s102
      %s105 = sphi 0, %s104
      %s119 = sphi 0, %s105
      %s127 = sphi 0, %s129
      %s130 = sphi 0, %s127
      %s131 = sphi 0, %s130
      %s147 = sphi 0, %s131
    $region4: #{upsample_forward.1} parent=1 // loop_header_branch
      %15 = sbr.rel (%p13) target = $region8
    $region5: #{upsample_forward.1} parent=1 // loop_body
      %s17 = ssub.s32 %s12, 1
      %s18 = ssub.s32 %s12, 2
      %s25 = sadd.s32 1, %s20
      %p26 = scmp.ge.s32.totalorder %s25, 1
      %s27 = scalar_select %p26, 0, %s25
      %s28 = sadd.s32 1, %s19
      %s29 = scalar_select %p26, %s28, %s19
      %p30 = scmp.ge.s32.totalorder %s29, 2
      %s31 = scalar_select %p30, 0, %s29
      %s32 = ssub.s32 %s19, %s31
      %s33 = ssub.s32 %s20, %s27
      %s34 = sor.u32 %s32, %s33
      %p35 = scmp.eq.s32.totalorder %s34, 0
      %s37 = sadd.s32 %s36, 1
      %s38 = scalar_select %p35, %s36, %s37
      %p41 = pneg %p35
      %p42 = scmp.eq.s32.totalorder %s12, 1
      %p43 = por %p41, %p42
      %p44 = scmp.ne.s32.totalorder %s36, %s39
      %p45 = scmp.eq.s32.totalorder %s12, 0
      %p46 = por %p44, %p45
      %p47 = scmp.ne.s32.totalorder %s36, %s39
      %p48 = scmp.eq.s32.totalorder %s17, 1
      %p49 = por %p47, %p48
      %p50 = scmp.ne.s32.totalorder %s39, %s40
      %p51 = scmp.eq.s32.totalorder %s17, 0
      %p52 = por %p50, %p51
      %p53 = scmp.ne.s32.totalorder %s39, %s40
      %p54 = scmp.eq.s32.totalorder %s18, 1
      %p55 = por %p53, %p54
      %p57 = scmp.ne.s32.totalorder %s40, %s56
      %p58 = scmp.eq.s32.totalorder %s18, 0
      %p59 = por %p57, %p58
      %s61 = sadd.s32 %s60, 1
      %p64 = scmp.eq.s32.totalorder %s12, 1
      %p65 = scmp.ne.s32.totalorder %s60, %s62
      %p66 = scmp.eq.s32.totalorder %s12, 0
      %p67 = por %p65, %p66
      %p68 = scmp.ne.s32.totalorder %s60, %s62
      %p69 = scmp.eq.s32.totalorder %s17, 1
      %p70 = por %p68, %p69
      %p71 = scmp.ne.s32.totalorder %s62, %s63
      %p72 = scmp.eq.s32.totalorder %s17, 0
      %p73 = por %p71, %p72
      %p74 = scmp.ne.s32.totalorder %s62, %s63
      %p75 = scmp.eq.s32.totalorder %s18, 1
      %p76 = por %p74, %p75
      %p78 = scmp.ne.s32.totalorder %s63, %s77
      %p79 = scmp.eq.s32.totalorder %s18, 0
      %p80 = por %p78, %p79
      %s82 = sadd.s32 %s81, 1
      %p85 = scmp.eq.s32.totalorder %s12, 1
      %p86 = scmp.ne.s32.totalorder %s81, %s83
      %p87 = scmp.eq.s32.totalorder %s12, 0
      %p88 = por %p86, %p87
      %p89 = scmp.ne.s32.totalorder %s81, %s83
      %p90 = scmp.eq.s32.totalorder %s17, 1
      %p91 = por %p89, %p90
      %p92 = scmp.ne.s32.totalorder %s83, %s84
      %p93 = scmp.eq.s32.totalorder %s17, 0
      %p94 = por %p92, %p93
      %p95 = scmp.ne.s32.totalorder %s83, %s84
      %p96 = scmp.eq.s32.totalorder %s18, 1
      %p97 = por %p95, %p96
      %p99 = scmp.ne.s32.totalorder %s84, %s98
      %p100 = scmp.eq.s32.totalorder %s18, 0
      %p101 = por %p99, %p100
      %s103 = sadd.s32 %s102, 1
      %p106 = scmp.eq.s32.totalorder %s12, 1
      %p107 = scmp.ne.s32.totalorder %s102, %s104
      %p108 = scmp.eq.s32.totalorder %s12, 0
      %p109 = por %p107, %p108
      %p110 = scmp.ne.s32.totalorder %s102, %s104
      %p111 = scmp.eq.s32.totalorder %s17, 1
      %p112 = por %p110, %p111
      %p113 = scmp.ne.s32.totalorder %s104, %s105
      %p114 = scmp.eq.s32.totalorder %s17, 0
      %p115 = por %p113, %p114
      %p116 = scmp.ne.s32.totalorder %s104, %s105
      %p117 = scmp.eq.s32.totalorder %s18, 1
      %p118 = por %p116, %p117
      %p120 = scmp.ne.s32.totalorder %s105, %s119
      %p121 = scmp.eq.s32.totalorder %s18, 0
      %p122 = por %p120, %p121
      %s123 = ssub.s32 %s19, %s31
      %s124 = ssub.s32 %s20, %s27
      %s125 = sor.u32 %s123, %s124
      %p126 = scmp.eq.s32.totalorder %s125, 0
      %s128 = sadd.s32 %s127, 1
      %s129 = scalar_select %p126, %s127, %s128
      %p132 = pneg %p126
      %p133 = scmp.eq.s32.totalorder %s12, 1
      %p134 = por %p132, %p133
      %p135 = scmp.ne.s32.totalorder %s127, %s130
      %p136 = scmp.eq.s32.totalorder %s12, 0
      %p137 = por %p135, %p136
      %p138 = scmp.ne.s32.totalorder %s127, %s130
      %p139 = scmp.eq.s32.totalorder %s17, 1
      %p140 = por %p138, %p139
      %p141 = scmp.ne.s32.totalorder %s130, %s131
      %p142 = scmp.eq.s32.totalorder %s17, 0
      %p143 = por %p141, %p142
      %p144 = scmp.ne.s32.totalorder %s130, %s131
      %p145 = scmp.eq.s32.totalorder %s18, 1
      %p146 = por %p144, %p145
      %p148 = scmp.ne.s32.totalorder %s131, %s147
      %p149 = scmp.eq.s32.totalorder %s18, 0
      %p150 = por %p148, %p149
      %p151 = scmp.le.s32.totalorder 1, %s12
      %p152 = scmp.lt.s32.totalorder %s12, 3
      %p153 = pnand %p151, %p152
      %p154 = pneg %p153
      // Predicated region
      $region9: #{upsample_forward.1} parent=5 // pred_check
        _
      $region10: #{upsample_forward.1} parent=5 // pred_check_branch
        %156 = sbr.rel (%p153) target = $region12
      $region11: #{upsample_forward.1} parent=5 // pred_region
        %s157 = ssub.s32 %s12, 1
        // Predicated region
        $region13: #{upsample_forward.1} parent=11 // pred_check
          %p158 = pneg %p73
        $region14: #{upsample_forward.1} parent=11 // pred_check_branch
          %160 = sbr.rel (%p158) target = $region16
        $region15: #{upsample_forward.1} parent=11 // pred_region
          _
        $region16: #{upsample_forward.1} parent=11 // pred_fallthru
          _
        // Predicated region
        $region17: #{upsample_forward.1} parent=11 // pred_check
          %p161 = pneg %p94
        $region18: #{upsample_forward.1} parent=11 // pred_check_branch
          %163 = sbr.rel (%p161) target = $region20
        $region19: #{upsample_forward.1} parent=11 // pred_region
          %s165 = ssub.s32 128, 128
          %166 = vsyncadd [#allocation3], %s165
          %s168 = sshll.u32 %s2, 4
          %s169 = int_to_ptr.vmem [resolvable:$true] %s168
          %171 = dma.vmem_to_smem %s169, 128, [#allocation2], [#allocation3]
        $region20: #{upsample_forward.1} parent=11 // pred_fallthru
          _
        // Predicated region
        $region21: #{upsample_forward.1} parent=11 // pred_check
          %p172 = pneg %p115
        $region22: #{upsample_forward.1} parent=11 // pred_check_branch
          %174 = sbr.rel (%p172) target = $region24
        $region23: #{upsample_forward.1} parent=11 // pred_region
          %s176 = ssub.s32 16, 16
          %177 = vsyncadd [#allocation5], %s176
          %s179 = sshll.u32 %s3, 4
          %s180 = int_to_ptr.vmem [resolvable:$true] %s179
          %182 = dma.vmem_to_smem %s180, 16, [#allocation4], [#allocation5]
        $region24: #{upsample_forward.1} parent=11 // pred_fallthru
          _
      $region12: #{upsample_forward.1} parent=5 // pred_fallthru
        _
      %p183 = scmp.lt.s32.totalorder %s12, 2
      // Predicated region
      $region25: #{upsample_forward.1} parent=5 // pred_check
        %p184 = pneg %p183
      $region26: #{upsample_forward.1} parent=5 // pred_check_branch
        %186 = sbr.rel (%p184) target = $region28
      $region27: #{upsample_forward.1} parent=5 // pred_region
        // Predicated region
        $region29: #{upsample_forward.1} parent=27 // pred_check
          %p187 = pneg %p46
        $region30: #{upsample_forward.1} parent=27 // pred_check_branch
          %189 = sbr.rel (%p187) target = $region32
        $region31: #{upsample_forward.1} parent=27 // pred_region
          %p190 = scmp.lt.s32.totalorder %s19, 1
          %s191 = scalar_select %p190, %s19, 1
          %p192 = scmp.lt.s32.totalorder %s20, 0
          %s193 = scalar_select %p192, %s20, 0
          %s194 = smul.addr %s191, 4
          %s195 = sadd.s32 %s193, %s194
          %s196 = smul.addr %s195, 8
          %s197 = scalar_lea.vmem %s0, %s196
        $region32: #{upsample_forward.1} parent=27 // pred_fallthru
          _
      $region28: #{upsample_forward.1} parent=5 // pred_fallthru
        _
      %p198 = scmp.le.s32.totalorder 1, %s12
      %p199 = scmp.lt.s32.totalorder %s12, 3
      %p200 = pnand %p198, %p199
      %p201 = pneg %p200
      // Predicated region
      $region33: #{upsample_forward.1} parent=5 // pred_check
        _
      $region34: #{upsample_forward.1} parent=5 // pred_check_branch
        %203 = sbr.rel (%p200) target = $region36
      $region35: #{upsample_forward.1} parent=5 // pred_region
        %s204 = ssub.s32 %s12, 1
        // Predicated region
        $region37: #{upsample_forward.1} parent=35 // pred_check
          %p205 = pneg %p94
        $region38: #{upsample_forward.1} parent=35 // pred_check_branch
          %207 = sbr.rel (%p205) target = $region40
        $region39: #{upsample_forward.1} parent=35 // pred_region
          %208 = dma.done [#allocation3], 128
        $region40: #{upsample_forward.1} parent=35 // pred_fallthru
          _
        // Predicated region
        $region41: #{upsample_forward.1} parent=35 // pred_check
          %p209 = pneg %p115
        $region42: #{upsample_forward.1} parent=35 // pred_check_branch
          %211 = sbr.rel (%p209) target = $region44
        $region43: #{upsample_forward.1} parent=35 // pred_region
          %212 = dma.done [#allocation5], 16
        $region44: #{upsample_forward.1} parent=35 // pred_fallthru
          _
        %213 = sfence
        %p214 = scmp.lt.s32.totalorder %s21, 1
        %s215 = scalar_select %p214, %s21, 1
        %p216 = scmp.lt.s32.totalorder %s22, 0
        %s217 = scalar_select %p216, %s22, 0
        %s218 = smul.addr %s215, 4
        %s219 = sadd.s32 %s217, %s218
        %s220 = smul.addr %s219, 8
        %s221 = scalar_lea.vmem %s0, %s220
        %p222 = pneg %p52
        %p223 = pneg %p49
        %p224 = pneg %p73
        %p225 = pneg %p70
        %p226 = pneg %p94
        %p227 = pneg %p91
        %p228 = pneg %p115
        %p229 = pneg %p112
        %p230 = pneg %p143
        %p231 = pneg %p140
        %p232 = scmp.lt.s32.totalorder %s21, 1
        %s233 = scalar_select %p232, %s21, 1
        %p234 = scmp.lt.s32.totalorder %s22, 0
        %s235 = scalar_select %p234, %s22, 0
        %s236 = smul.addr %s233, 8
        %s237 = sadd.s32 %s235, %s236
        %s238 = smul.addr %s237, 8
        %s239 = scalar_lea.vmem %s4, %s238
        %p240 = scmp.lt.s32.totalorder %s21, 1
        %s241 = scalar_select %p240, %s21, 1
        %p242 = scmp.lt.s32.totalorder %s22, 0
        %s243 = scalar_select %p242, %s22, 0
        %s244 = smul.addr %s241, 4
        %s245 = sadd.s32 %s243, %s244
        %s246 = smul.addr %s245, 8
        %s247 = scalar_lea.vmem %s0, %s246
        %p248 = scmp.lt.s32.totalorder %s21, 1
        %s249 = scalar_select %p248, %s21, 1
        %p250 = scmp.lt.s32.totalorder %s22, 0
        %s251 = scalar_select %p250, %s22, 0
        %s252 = smul.addr %s249, 8
        %s253 = sadd.s32 %s251, %s252
        %s254 = smul.addr %s253, 8
        %s255 = scalar_lea.vmem %s4, %s254
        %v256 = vld [vmem:[%s1] sm:$0xff]
        %v257 = vld [vmem:[%s1 + $0x8] sm:$0xff]
        %v258 = vld [vmem:[%s1 + $0x10] sm:$0xff]
        %v259 = vld [vmem:[%s1 + $0x18] sm:$0xff]
        %v260 = vld [vmem:[%s247] sm:$0xff]
        %s261 = scalar_lea.vmem %s247, 8
        %v262 = vld [vmem:[%s261] sm:$0xff]
        %s263 = scalar_lea.vmem %s247, 16
        %v264 = vld [vmem:[%s263] sm:$0xff]
        %s265 = scalar_lea.vmem %s247, 24
        %v266 = vld [vmem:[%s265] sm:$0xff]
        %s267 = sld [smem:[#allocation2]]
        %v268 = vstv %s267
        %v269 = vmul.f32 %v260, %v268
        %s270 = sld [smem:[#allocation2 + $0x1]]
        %v271 = vstv %s270
        %v272 = vmul.f32 %v262, %v271
        %v273 = vadd.f32 %v269, %v272
        %s274 = sld [smem:[#allocation2 + $0x2]]
        %v275 = vstv %s274
        %v276 = vmul.f32 %v264, %v275
        %v277 = vadd.f32 %v273, %v276
        %s278 = sld [smem:[#allocation2 + $0x3]]
        %v279 = vstv %s278
        %v280 = vmul.f32 %v266, %v279
        %v281 = vadd.f32 %v277, %v280
        %s282 = sld [smem:[#allocation4]]
        %v283 = vstv %s282
        %v284 = vadd.f32 %v281, %v283
        %vm285 = vcmp.gt.f32.partialorder %v284, 0.0
        %v286 = vmul.f32 %v284, 0.1
        %v287 = vsel %vm285, %v284, %v286
        %s288 = sld [smem:[#allocation2 + $0x80]]
        %v289 = vstv %s288
        %v290 = vmul.f32 %v260, %v289
        %s291 = sld [smem:[#allocation2 + $0x81]]
        %v292 = vstv %s291
        %v293 = vmul.f32 %v262, %v292
        %v294 = vadd.f32 %v290, %v293
        %s295 = sld [smem:[#allocation2 + $0x82]]
        %v296 = vstv %s295
        %v297 = vmul.f32 %v264, %v296
        %v298 = vadd.f32 %v294, %v297
        %s299 = sld [smem:[#allocation2 + $0x83]]
        %v300 = vstv %s299
        %v301 = vmul.f32 %v266, %v300
        %v302 = vadd.f32 %v298, %v301
        %s303 = sld [smem:[#allocation4 + $0x1]]
        %v304 = vstv %s303
        %v305 = vadd.f32 %v302, %v304
        %vm306 = vcmp.gt.f32.partialorder %v305, 0.0
        %v307 = vmul.f32 %v305, 0.1
        %v308 = vsel %vm306, %v305, %v307
        %s309 = sld [smem:[#allocation2 + $0x100]]
        %v310 = vstv %s309
        %v311 = vmul.f32 %v260, %v310
        %s312 = sld [smem:[#allocation2 + $0x101]]
        %v313 = vstv %s312
        %v314 = vmul.f32 %v262, %v313
        %v315 = vadd.f32 %v311, %v314
        %s316 = sld [smem:[#allocation2 + $0x102]]
        %v317 = vstv %s316
        %v318 = vmul.f32 %v264, %v317
        %v319 = vadd.f32 %v315, %v318
        %s320 = sld [smem:[#allocation2 + $0x103]]
        %v321 = vstv %s320
        %v322 = vmul.f32 %v266, %v321
        %v323 = vadd.f32 %v319, %v322
        %s324 = sld [smem:[#allocation4 + $0x2]]
        %v325 = vstv %s324
        %v326 = vadd.f32 %v323, %v325
        %vm327 = vcmp.gt.f32.partialorder %v326, 0.0
        %v328 = vmul.f32 %v326, 0.1
        %v329 = vsel %vm327, %v326, %v328
        %s330 = sld [smem:[#allocation2 + $0x180]]
        %v331 = vstv %s330
        %v332 = vmul.f32 %v260, %v331
        %s333 = sld [smem:[#allocation2 + $0x181]]
        %v334 = vstv %s333
        %v335 = vmul.f32 %v262, %v334
        %v336 = vadd.f32 %v332, %v335
        %s337 = sld [smem:[#allocation2 + $0x182]]
        %v338 = vstv %s337
        %v339 = vmul.f32 %v264, %v338
        %v340 = vadd.f32 %v336, %v339
        %s341 = sld [smem:[#allocation2 + $0x183]]
        %v342 = vstv %s341
        %v343 = vmul.f32 %v266, %v342
        %v344 = vadd.f32 %v340, %v343
        %s345 = sld [smem:[#allocation4 + $0x3]]
        %v346 = vstv %s345
        %v347 = vadd.f32 %v344, %v346
        %vm348 = vcmp.gt.f32.partialorder %v347, 0.0
        %v349 = vmul.f32 %v347, 0.1
        %v350 = vsel %vm348, %v347, %v349
        %s351 = sld [smem:[#allocation2 + $0x200]]
        %v352 = vstv %s351
        %v353 = vmul.f32 %v260, %v352
        %s354 = sld [smem:[#allocation2 + $0x201]]
        %v355 = vstv %s354
        %v356 = vmul.f32 %v262, %v355
        %v357 = vadd.f32 %v353, %v356
        %s358 = sld [smem:[#allocation2 + $0x202]]
        %v359 = vstv %s358
        %v360 = vmul.f32 %v264, %v359
        %v361 = vadd.f32 %v357, %v360
        %s362 = sld [smem:[#allocation2 + $0x203]]
        %v363 = vstv %s362
        %v364 = vmul.f32 %v266, %v363
        %v365 = vadd.f32 %v361, %v364
        %s366 = sld [smem:[#allocation4 + $0x4]]
        %v367 = vstv %s366
        %v368 = vadd.f32 %v365, %v367
        %vm369 = vcmp.gt.f32.partialorder %v368, 0.0
        %v370 = vmul.f32 %v368, 0.1
        %v371 = vsel %vm369, %v368, %v370
        %s372 = sld [smem:[#allocation2 + $0x280]]
        %v373 = vstv %s372
        %v374 = vmul.f32 %v260, %v373
        %s375 = sld [smem:[#allocation2 + $0x281]]
        %v376 = vstv %s375
        %v377 = vmul.f32 %v262, %v376
        %v378 = vadd.f32 %v374, %v377
        %s379 = sld [smem:[#allocation2 + $0x282]]
        %v380 = vstv %s379
        %v381 = vmul.f32 %v264, %v380
        %v382 = vadd.f32 %v378, %v381
        %s383 = sld [smem:[#allocation2 + $0x283]]
        %v384 = vstv %s383
        %v385 = vmul.f32 %v266, %v384
        %v386 = vadd.f32 %v382, %v385
        %s387 = sld [smem:[#allocation4 + $0x5]]
        %v388 = vstv %s387
        %v389 = vadd.f32 %v386, %v388
        %vm390 = vcmp.gt.f32.partialorder %v389, 0.0
        %v391 = vmul.f32 %v389, 0.1
        %v392 = vsel %vm390, %v389, %v391
        %s393 = sld [smem:[#allocation2 + $0x300]]
        %v394 = vstv %s393
        %v395 = vmul.f32 %v260, %v394
        %s396 = sld [smem:[#allocation2 + $0x301]]
        %v397 = vstv %s396
        %v398 = vmul.f32 %v262, %v397
        %v399 = vadd.f32 %v395, %v398
        %s400 = sld [smem:[#allocation2 + $0x302]]
        %v401 = vstv %s400
        %v402 = vmul.f32 %v264, %v401
        %v403 = vadd.f32 %v399, %v402
        %s404 = sld [smem:[#allocation2 + $0x303]]
        %v405 = vstv %s404
        %v406 = vmul.f32 %v266, %v405
        %v407 = vadd.f32 %v403, %v406
        %s408 = sld [smem:[#allocation4 + $0x6]]
        %v409 = vstv %s408
        %v410 = vadd.f32 %v407, %v409
        %vm411 = vcmp.gt.f32.partialorder %v410, 0.0
        %v412 = vmul.f32 %v410, 0.1
        %v413 = vsel %vm411, %v410, %v412
        %s414 = sld [smem:[#allocation2 + $0x380]]
        %v415 = vstv %s414
        %v416 = vmul.f32 %v260, %v415
        %s417 = sld [smem:[#allocation2 + $0x381]]
        %v418 = vstv %s417
        %v419 = vmul.f32 %v262, %v418
        %v420 = vadd.f32 %v416, %v419
        %s421 = sld [smem:[#allocation2 + $0x382]]
        %v422 = vstv %s421
        %v423 = vmul.f32 %v264, %v422
        %v424 = vadd.f32 %v420, %v423
        %s425 = sld [smem:[#allocation2 + $0x383]]
        %v426 = vstv %s425
        %v427 = vmul.f32 %v266, %v426
        %v428 = vadd.f32 %v424, %v427
        %s429 = sld [smem:[#allocation4 + $0x7]]
        %v430 = vstv %s429
        %v431 = vadd.f32 %v428, %v430
        %vm432 = vcmp.gt.f32.partialorder %v431, 0.0
        %v433 = vmul.f32 %v431, 0.1
        %v434 = vsel %vm432, %v431, %v433
        %vm435 = vcmask 261120
        %v437 = vsel %vm435, %v287, 0
        %v440 = vsel %vm435, %v308, 0
        %v443 = vsel %vm435, %v329, 0
        %v446 = vsel %vm435, %v350, 0
        %v449 = vsel %vm435, %v371, 0
        %v452 = vsel %vm435, %v392, 0
        %v455 = vsel %vm435, %v413, 0
        %v458 = vsel %vm435, %v434, 0
        %460 = vmatprep.subr.mxu0 0.0
        %461 = vmatpush1.msra.mxu0 %v256
        %462 = vmatprep.subr.mxu0 0.0
        %463 = vmatpush1.msra.mxu0 %v257
        %464 = vmatprep.subr.mxu0 0.0
        %465 = vmatpush1.msra.mxu0 %v258
        %466 = vmatprep.subr.mxu0 0.0
        %467 = vmatpush1.msra.mxu0 %v259
        %468 = vmatprep.subr.mxu0 0.0
        %469 = vmatpush1.msra.mxu0 0.0
        %470 = vmatprep.subr.mxu0 0.0
        %471 = vmatpush1.msra.mxu0 0.0
        %472 = vmatprep.subr.mxu0 0.0
        %473 = vmatpush1.msra.mxu0 0.0
        %474 = vmatprep.subr.mxu0 0.0
        %475 = vmatpush1.msra.mxu0 0.0
        %476 = vmatprep.subr.mxu0 0.0
        %477 = vmatpush1.msra.mxu0 0.0
        %478 = vmatprep.subr.mxu0 0.0
        %479 = vmatpush1.msra.mxu0 0.0
        %480 = vmatprep.subr.mxu0 0.0
        %481 = vmatpush1.msra.mxu0 0.0
        %482 = vmatprep.subr.mxu0 0.0
        %483 = vmatpush1.msra.mxu0 0.0
        %484 = vmatprep.subr.mxu0 0.0
        %485 = vmatpush1.msra.mxu0 0.0
        %486 = vmatprep.subr.mxu0 0.0
        %487 = vmatpush1.msra.mxu0 0.0
        %488 = vmatprep.subr.mxu0 0.0
        %489 = vmatpush1.msra.mxu0 0.0
        %490 = vmatprep.subr.mxu0 0.0
        %491 = vmatpush1.msra.mxu0 0.0
        %492 = vmatprep.subr.mxu0 0.0
        %493 = vmatpush1.msra.mxu0 0.0
        %494 = vmatprep.subr.mxu0 0.0
        %495 = vmatpush1.msra.mxu0 0.0
        %496 = vmatprep.subr.mxu0 0.0
        %497 = vmatpush1.msra.mxu0 0.0
        %498 = vmatprep.subr.mxu0 0.0
        %499 = vmatpush1.msra.mxu0 0.0
        %500 = vmatprep.subr.mxu0 0.0
        %501 = vmatpush1.msra.mxu0 0.0
        %502 = vmatprep.subr.mxu0 0.0
        %503 = vmatpush1.msra.mxu0 0.0
        %504 = vmatprep.subr.mxu0 0.0
        %505 = vmatpush1.msra.mxu0 0.0
        %506 = vmatprep.subr.mxu0 0.0
        %507 = vmatpush1.msra.mxu0 0.0
        %508 = vmatprep.subr.mxu0 0.0
        %509 = vmatpush1.msra.mxu0 0.0
        %510 = vmatprep.subr.mxu0 0.0
        %511 = vmatpush1.msra.mxu0 0.0
        %512 = vmatprep.subr.mxu0 0.0
        %513 = vmatpush1.msra.mxu0 0.0
        %514 = vmatprep.subr.mxu0 0.0
        %515 = vmatpush1.msra.mxu0 0.0
        %516 = vmatprep.subr.mxu0 0.0
        %517 = vmatpush1.msra.mxu0 0.0
        %518 = vmatprep.subr.mxu0 0.0
        %519 = vmatpush1.msra.mxu0 0.0
        %520 = vmatprep.subr.mxu0 0.0
        %521 = vmatpush1.msra.mxu0 0.0
        %522 = vmatprep.subr.mxu0 0.0
        %523 = vmatpush1.msra.mxu0 0.0
        %524 = vmatprep.mubr.f32.mxu0 0.0
        %525 = vmatmul.mubr.f32.gmra.mrb[0].mxu0 %v437
        %v526 = vpop.f32.mrb[0].mxu0
        %v527 = vadd.f32 0.0, %v526
        %v528 = vpop.f32.mrb[0].mxu0
        %529 = vmatprep.mubr.f32.mxu0 0.0
        %530 = vmatmul.mubr.f32.gmra.mrb[0].mxu0 %v440
        %v531 = vpop.f32.mrb[0].mxu0
        %v532 = vadd.f32 0.0, %v531
        %v533 = vpop.f32.mrb[0].mxu0
        %534 = vmatprep.mubr.f32.mxu0 0.0
        %535 = vmatmul.mubr.f32.gmra.mrb[0].mxu0 %v443
        %v536 = vpop.f32.mrb[0].mxu0
        %v537 = vadd.f32 0.0, %v536
        %v538 = vpop.f32.mrb[0].mxu0
        %539 = vmatprep.mubr.f32.mxu0 0.0
        %540 = vmatmul.mubr.f32.gmra.mrb[0].mxu0 %v446
        %v541 = vpop.f32.mrb[0].mxu0
        %v542 = vadd.f32 0.0, %v541
        %v543 = vpop.f32.mrb[0].mxu0
        %544 = vmatprep.mubr.f32.mxu0 0.0
        %545 = vmatmul.mubr.f32.gmra.mrb[0].mxu0 %v449
        %v546 = vpop.f32.mrb[0].mxu0
        %v547 = vadd.f32 0.0, %v546
        %v548 = vpop.f32.mrb[0].mxu0
        %549 = vmatprep.mubr.f32.mxu0 0.0
        %550 = vmatmul.mubr.f32.gmra.mrb[0].mxu0 %v452
        %v551 = vpop.f32.mrb[0].mxu0
        %v552 = vadd.f32 0.0, %v551
        %v553 = vpop.f32.mrb[0].mxu0
        %554 = vmatprep.mubr.f32.mxu0 0.0
        %555 = vmatmul.mubr.f32.gmra.mrb[0].mxu0 %v455
        %v556 = vpop.f32.mrb[0].mxu0
        %v557 = vadd.f32 0.0, %v556
        %v558 = vpop.f32.mrb[0].mxu0
        %559 = vmatprep.mubr.f32.mxu0 0.0
        %560 = vmatmul.mubr.f32.gmra.mrb[0].mxu0 %v458
        %v561 = vpop.f32.mrb[0].mxu0
        %v562 = vadd.f32 0.0, %v561
        %v563 = vpop.f32.mrb[0].mxu0
        %564 = vdwg.mxu0
        %565 = vst [vmem:[%s255] sm:$0xff] %v527
        %566 = vst [vmem:[%s255 + $0x8] sm:$0xff] %v532
        %567 = vst [vmem:[%s255 + $0x10] sm:$0xff] %v537
        %568 = vst [vmem:[%s255 + $0x18] sm:$0xff] %v542
        %569 = vst [vmem:[%s255 + $0x20] sm:$0xff] %v547
        %570 = vst [vmem:[%s255 + $0x28] sm:$0xff] %v552
        %571 = vst [vmem:[%s255 + $0x30] sm:$0xff] %v557
        %572 = vst [vmem:[%s255 + $0x38] sm:$0xff] %v562
        %p573 = scmp.lt.s32.totalorder %s21, 1
        %s574 = scalar_select %p573, %s21, 1
        %p575 = scmp.lt.s32.totalorder %s22, 0
        %s576 = scalar_select %p575, %s22, 0
        %s577 = smul.addr %s574, 8
        %s578 = sadd.s32 %s576, %s577
        %s579 = smul.addr %s578, 8
        %s580 = scalar_lea.vmem %s4, %s579
        // Predicated region
        $region45: #{upsample_forward.1} parent=35 // pred_check
          %p581 = pneg %p140
        $region46: #{upsample_forward.1} parent=35 // pred_check_branch
          %583 = sbr.rel (%p581) target = $region48
        $region47: #{upsample_forward.1} parent=35 // pred_region
          _
        $region48: #{upsample_forward.1} parent=35 // pred_fallthru
          _
      $region36: #{upsample_forward.1} parent=5 // pred_fallthru
        _
      %p584 = scmp.le.s32.totalorder 2, %s12
      // Predicated region
      $region49: #{upsample_forward.1} parent=5 // pred_check
        %p585 = pneg %p584
      $region50: #{upsample_forward.1} parent=5 // pred_check_branch
        %587 = sbr.rel (%p585) target = $region52
      $region51: #{upsample_forward.1} parent=5 // pred_region
        %s588 = ssub.s32 %s12, 2
        // Predicated region
        $region53: #{upsample_forward.1} parent=51 // pred_check
          %p589 = pneg %p146
        $region54: #{upsample_forward.1} parent=51 // pred_check_branch
          %591 = sbr.rel (%p589) target = $region56
        $region55: #{upsample_forward.1} parent=51 // pred_region
          %p592 = scmp.lt.s32.totalorder %s23, 1
          %s593 = scalar_select %p592, %s23, 1
          %p594 = scmp.lt.s32.totalorder %s24, 0
          %s595 = scalar_select %p594, %s24, 0
          %s596 = smul.addr %s593, 8
          %s597 = sadd.s32 %s595, %s596
          %s598 = smul.addr %s597, 8
          %s599 = scalar_lea.vmem %s4, %s598
        $region56: #{upsample_forward.1} parent=51 // pred_fallthru
          _
      $region52: #{upsample_forward.1} parent=5 // pred_fallthru
        _
    $region6: #{upsample_forward.1} parent=1 // loop_footer
      %s16 = sadd.s32 1, %s12
    $region7: #{upsample_forward.1} parent=1 // loop_footer_branch
      %11 = sbr.rel target = $region3
    $region8: #{upsample_forward.1} parent=1 // loop_exit
      _
    %600 = vsyncpa [#allocation3], 1
    %s601 = scalar_lea.sflag [#allocation3], 1
    %602 = vsyncpa %s601, 1
    %603 = vsyncpa [#allocation5], 1

</llo_original>
